<compile_context>
chip_gen: v5e
topology: v5e:2x2
jax: 0.10.0
libtpu: 0.0.40
codegen_flags: <defaults>
</compile_context>

<pallas_src>
import functools

import jax
import jax.numpy as jnp
from jax import lax
from jax.experimental import pallas as pl
from jax.experimental.pallas import tpu as pltpu

MARGIN = 0.7
_COS_EPS = 1e-8    # torch.nn.functional.cosine_similarity eps
_NORM_EPS = 1e-12  # torch.nn.functional.normalize eps


def _inter_contrastive_kernel(lab_row_ref, lab_col_ref, img_ref, txt_ref, part_ref,
                              *, margin):
    """One (row-tile i, col-tile j) block of the (B, B) pair matrix.

    part_ref is a (1, 1, 3) f32 block, resident across the inner j axis, holding
    this row tile's running [pos_sum, neg_sum, neg_cnt].
    """
    i = pl.program_id(0)
    j = pl.program_id(1)

    img = img_ref[...].astype(jnp.float32)   # (TB, D)
    txt = txt_ref[...].astype(jnp.float32)   # (TB, D)

    # Row-wise L2 normalization via reciprocal multiply (no (TB,D)/(TB,1) divide).
    img_norm = jnp.sqrt(jnp.sum(img * img, axis=1, keepdims=True))   # (TB, 1)
    txt_norm = jnp.sqrt(jnp.sum(txt * txt, axis=1, keepdims=True))   # (TB, 1)
    img_n = img * (1.0 / jnp.maximum(img_norm, _NORM_EPS))
    txt_n = txt * (1.0 / jnp.maximum(txt_norm, _NORM_EPS))

    # sim[a, b] = <img_n[a], txt_n[b]>; contracting both operands on their last
    # (lane) dim feeds the MXU without materializing txt_n.T.
    sim = lax.dot_general(img_n, txt_n, (((1,), (1,)), ((), ())),
                          preferred_element_type=jnp.float32)        # (TB, TB)

    # neg_mask[a, b] = labels[row a] != labels[col b]  (VPU broadcast compare).
    neg_mask = lab_row_ref[...] != lab_col_ref[...]                  # (TB, TB)

    # PyTorch drops exact zeros of (all_dist * neg_mask) before the relu.  With
    # all_dist = 1 - sim, (1 - sim) == 0  <=>  sim == 1 exactly in f32, so the
    # dynamic-shape gather becomes a masked reduction gated on `sim != 1`.
    valid = jnp.logical_and(neg_mask, sim != 1.0).astype(jnp.float32)
    # Fused hinge: max(margin - (1 - sim), 0) == max((margin - 1) + sim, 0);
    # the all_dist temporary is never materialized.
    hinge = jnp.maximum((margin - 1.0) + sim, 0.0)
    neg_sum = jnp.sum(hinge * valid)
    neg_cnt = jnp.sum(valid)

    lane = lax.broadcasted_iota(jnp.int32, part_ref.shape, 2)        # (1, 1, 3)

    @pl.when(j == 0)
    def _():
        part_ref[...] = jnp.zeros_like(part_ref)

    part_ref[...] = part_ref[...] + (jnp.where(lane == 1, neg_sum, 0.0)
                                     + jnp.where(lane == 2, neg_cnt, 0.0))

    # Paired (img_r, txt_r) cosine terms live only on diagonal tiles; take them
    # from diag(sim) instead of a separate (TB, D) pair-dot reduce.
    # (eps caveat: clamps at 1e-12 instead of cosine_similarity's 1e-8; only
    #  observable for rows whose norm is < 1e-8.)
    @pl.when(i == j)
    def _():
        ra = lax.broadcasted_iota(jnp.int32, sim.shape, 0)
        ca = lax.broadcasted_iota(jnp.int32, sim.shape, 1)
        pos_sum = jnp.sum(jnp.where(ra == ca, 1.0 - sim, 0.0))
        part_ref[...] = part_ref[...] + jnp.where(lane == 0, pos_sum, 0.0)


def inter_contrastive_loss(labels, img_embs, text_embs, margin=MARGIN, block_b=None):
    """Pallas InterContrastiveLoss. labels: (B,) int; img/text_embs: (B, D)."""
    B, D = img_embs.shape
    assert text_embs.shape == (B, D)

    if block_b is None:
        # MXU-aligned row/col tiles: 512/256 suit the 256x256 MXU on v6e/v7x,
        # 128 suits v5e's 128x128 MXU; fall back to the whole batch when B is
        # small or not evenly divisible.
        for cand in (512, 256, 128):
            if B % cand == 0:
                block_b = cand
                break
        else:
            block_b = B  # TODO(synk): pad/mask ragged B instead of going un-tiled.
    tb = block_b
    n_row = B // tb
    n_col = B // tb

    lab = labels.astype(jnp.int32)
    lab_row = lab.reshape(B, 1)   # labels down the sublanes (row tiles)
    lab_col = lab.reshape(1, B)   # labels across the lanes  (col tiles)

    # Scoped-VMEM budget: double-buffered input tiles (native dtype) + f32 and
    # normalized copies + (tb, tb) sim/mask/hinge temporaries, with headroom.
    in_bytes = jnp.dtype(img_embs.dtype).itemsize
    d_pad = ((D + 127) // 128) * 128
    vmem_bytes = (4 * tb * d_pad * in_bytes     # img+txt tiles, double-buffered
                  + 4 * tb * d_pad * 4          # f32 casts + normalized copies
                  + 4 * tb * tb * 4             # sim / mask / hinge temporaries
                  + (2 << 20))                  # headroom
    vmem_bytes = int(min(max(vmem_bytes, 4 << 20), 64 << 20))

    parts = pl.pallas_call(
        functools.partial(_inter_contrastive_kernel, margin=float(margin)),
        out_shape=jax.ShapeDtypeStruct((n_row, 1, 3), jnp.float32),
        grid_spec=pltpu.PrefetchScalarGridSpec(
            num_scalar_prefetch=0,
            grid=(n_row, n_col),   # j (col) inner -> img row tile re-used across j
            in_specs=[
                pl.BlockSpec((tb, 1), lambda i, j: (i, 0)),
                pl.BlockSpec((1, tb), lambda i, j: (0, j)),
                pl.BlockSpec((tb, D), lambda i, j: (i, 0)),
                pl.BlockSpec((tb, D), lambda i, j: (j, 0)),
            ],
            out_specs=pl.BlockSpec((1, 1, 3), lambda i, j: (i, 0, 0)),
        ),
        compiler_params=pltpu.CompilerParams(
            dimension_semantics=("parallel", "arbitrary"),
            vmem_limit_bytes=vmem_bytes,
        ),
    )(lab_row, lab_col, img_embs, text_embs)

    pos_sum = jnp.sum(parts[:, 0, 0])
    neg_sum = jnp.sum(parts[:, 0, 1])
    neg_cnt = jnp.sum(parts[:, 0, 2])
    # mean(cat([pos_loss (B,), neg_loss (K,)])) == (sum_pos + sum_neg) / (B + K)
    return (pos_sum + neg_sum) / (jnp.float32(B) + neg_cnt)


def inter_contrastive_loss_ref(labels, img_embs, text_embs, margin=MARGIN):
    """Pure-JAX reference mirroring the PyTorch module (correctness check)."""
    bs = img_embs.shape[0]
    img_norm = jnp.sqrt(jnp.sum(img_embs * img_embs, axis=1))
    txt_norm = jnp.sqrt(jnp.sum(text_embs * text_embs, axis=1))
    cos = jnp.sum(img_embs * text_embs, axis=1) / (
        jnp.maximum(img_norm, _COS_EPS) * jnp.maximum(txt_norm, _COS_EPS))
    pos_loss = 1.0 - cos                                              # (B,)
    img_n = img_embs / jnp.maximum(img_norm, _NORM_EPS)[:, None]
    txt_n = text_embs / jnp.maximum(txt_norm, _NORM_EPS)[:, None]
    all_dist = 1.0 - img_n @ txt_n.T                                  # (B, B)
    neg_mask = (labels[:, None] != labels[None, :]).astype(jnp.float32)
    neg_dist = all_dist * neg_mask
    valid = neg_dist != 0.0
    neg_loss = jnp.where(valid, jnp.maximum(margin - neg_dist, 0.0), 0.0)
    total = jnp.sum(pos_loss) + jnp.sum(neg_loss)
    count = bs + jnp.sum(valid.astype(jnp.float32))
    return total / count


if __name__ == "__main__":
    key = jax.random.PRNGKey(0)
    k1, k2, k3 = jax.random.split(key, 3)
    B, D = 8, 32
    img_embs = jax.random.normal(k1, (B, D), dtype=jnp.float32)
    text_embs = jax.random.normal(k2, (B, D), dtype=jnp.float32) + 0.1
    labels = jax.random.randint(k3, (B,), 0, 3)   # repeated labels -> real neg mask

    loss = inter_contrastive_loss(labels, img_embs, text_embs)
    jax.block_until_ready(loss)

    ref = inter_contrastive_loss_ref(labels, img_embs, text_embs)
    assert jnp.allclose(loss, ref, rtol=1e-4, atol=1e-5), (loss, ref)

    print("KERNEL_OK")
</pallas_src>

<mosaic_0001>
module attributes {stable_mosaic.version = 11 : i64} {
  func.func @_inter_contrastive_kernel(%arg0: i32, %arg1: i32, %arg2: memref<8x1xi32, #tpu.memory_space<vmem>>, %arg3: memref<1x8xi32, #tpu.memory_space<vmem>>, %arg4: memref<8x32xf32, #tpu.memory_space<vmem>>, %arg5: memref<8x32xf32, #tpu.memory_space<vmem>>, %arg6: memref<1x1x3xf32, #tpu.memory_space<vmem>>) attributes {dimension_semantics = [#tpu.dimension_semantics<parallel>, #tpu.dimension_semantics<arbitrary>], iteration_bounds = array<i64: 1, 1>, scalar_prefetch = 0 : i64, scratch_operands = 0 : i64, tpu.core_type = #tpu.core_type<tc>, window_params = [{transform_indices = @transform_0, window_bounds = array<i64: 8, 1>}, {transform_indices = @transform_1, window_bounds = array<i64: 1, 8>}, {transform_indices = @transform_2, window_bounds = array<i64: 8, 32>}, {transform_indices = @transform_3, window_bounds = array<i64: 8, 32>}, {transform_indices = @transform_4, window_bounds = array<i64: 1, 1, 3>}]} {
    %c0 = arith.constant 0 : index
    %c0_0 = arith.constant 0 : index
    %0 = vector.load %arg4[%c0, %c0_0] : memref<8x32xf32, #tpu.memory_space<vmem>>, vector<8x32xf32>
    %c0_1 = arith.constant 0 : index
    %c0_2 = arith.constant 0 : index
    %1 = vector.load %arg5[%c0_1, %c0_2] : memref<8x32xf32, #tpu.memory_space<vmem>>, vector<8x32xf32>
    %2 = arith.mulf %0, %0 : vector<8x32xf32>
    %cst = arith.constant dense<0.000000e+00> : vector<8xf32>
    %3 = vector.multi_reduction <add>, %2, %cst [1] : vector<8x32xf32> to vector<8xf32>
    %4 = vector.shape_cast %3 : vector<8xf32> to vector<8x1xf32>
    %5 = math.sqrt %4 : vector<8x1xf32>
    %6 = arith.mulf %1, %1 : vector<8x32xf32>
    %cst_3 = arith.constant dense<0.000000e+00> : vector<8xf32>
    %7 = vector.multi_reduction <add>, %6, %cst_3 [1] : vector<8x32xf32> to vector<8xf32>
    %8 = vector.shape_cast %7 : vector<8xf32> to vector<8x1xf32>
    %9 = math.sqrt %8 : vector<8x1xf32>
    %cst_4 = arith.constant 9.99999996E-13 : f32
    %10 = vector.broadcast %cst_4 : f32 to vector<8x1xf32>
    %11 = arith.maximumf %5, %10 : vector<8x1xf32>
    %cst_5 = arith.constant 1.000000e+00 : f32
    %12 = vector.broadcast %cst_5 : f32 to vector<8x1xf32>
    %13 = arith.divf %12, %11 : vector<8x1xf32>
    %14 = vector.broadcast %13 : vector<8x1xf32> to vector<8x32xf32>
    %15 = arith.mulf %0, %14 : vector<8x32xf32>
    %cst_6 = arith.constant 9.99999996E-13 : f32
    %16 = vector.broadcast %cst_6 : f32 to vector<8x1xf32>
    %17 = arith.maximumf %9, %16 : vector<8x1xf32>
    %cst_7 = arith.constant 1.000000e+00 : f32
    %18 = vector.broadcast %cst_7 : f32 to vector<8x1xf32>
    %19 = arith.divf %18, %17 : vector<8x1xf32>
    %20 = vector.broadcast %19 : vector<8x1xf32> to vector<8x32xf32>
    %21 = arith.mulf %1, %20 : vector<8x32xf32>
    %cst_8 = arith.constant dense<0.000000e+00> : vector<8x8xf32>
    %22 = tpu.matmul %15, %21, %cst_8 {dimension_numbers = #tpu.dot_dimension_numbers<[1], [1], [0], [0], [0, 0, 1, 0], [], []>} : vector<8x32xf32>, vector<8x32xf32>, vector<8x8xf32> -> vector<8x8xf32>
    %c0_9 = arith.constant 0 : index
    %c0_10 = arith.constant 0 : index
    %23 = vector.load %arg2[%c0_9, %c0_10] : memref<8x1xi32, #tpu.memory_space<vmem>>, vector<8x1xi32>
    %c0_11 = arith.constant 0 : index
    %c0_12 = arith.constant 0 : index
    %24 = vector.load %arg3[%c0_11, %c0_12] : memref<1x8xi32, #tpu.memory_space<vmem>>, vector<1x8xi32>
    %25 = vector.broadcast %23 : vector<8x1xi32> to vector<8x8xi32>
    %26 = vector.broadcast %24 : vector<1x8xi32> to vector<8x8xi32>
    %27 = arith.cmpi ne, %25, %26 : vector<8x8xi32>
    %cst_13 = arith.constant 1.000000e+00 : f32
    %28 = vector.broadcast %cst_13 : f32 to vector<8x8xf32>
    %29 = arith.cmpf one, %22, %28 : vector<8x8xf32>
    %30 = arith.andi %27, %29 : vector<8x8xi1>
    %31 = arith.extui %30 : vector<8x8xi1> to vector<8x8xi32>
    %32 = arith.sitofp %31 : vector<8x8xi32> to vector<8x8xf32>
    %cst_14 = arith.constant -3.000000e-01 : f32
    %33 = vector.broadcast %cst_14 : f32 to vector<8x8xf32>
    %34 = arith.addf %33, %22 : vector<8x8xf32>
    %cst_15 = arith.constant 0.000000e+00 : f32
    %35 = vector.broadcast %cst_15 : f32 to vector<8x8xf32>
    %36 = arith.maximumf %34, %35 : vector<8x8xf32>
    %37 = arith.mulf %36, %32 : vector<8x8xf32>
    %38 = vector.shape_cast %37 : vector<8x8xf32> to vector<1x8x8xf32>
    %cst_16 = arith.constant dense<0.000000e+00> : vector<1xf32>
    %39 = vector.multi_reduction <add>, %38, %cst_16 [1, 2] : vector<1x8x8xf32> to vector<1xf32>
    %40 = vector.shape_cast %39 : vector<1xf32> to vector<1x1x1xf32>
    %41 = vector.extract %40[0, 0, 0] : f32 from vector<1x1x1xf32>
    %42 = vector.shape_cast %32 : vector<8x8xf32> to vector<1x8x8xf32>
    %cst_17 = arith.constant dense<0.000000e+00> : vector<1xf32>
    %43 = vector.multi_reduction <add>, %42, %cst_17 [1, 2] : vector<1x8x8xf32> to vector<1xf32>
    %44 = vector.shape_cast %43 : vector<1xf32> to vector<1x1x1xf32>
    %45 = vector.extract %44[0, 0, 0] : f32 from vector<1x1x1xf32>
    %46 = tpu.iota {dimensions = array<i32: 2>} : vector<1x1x3xi32>
    %c0_i32 = arith.constant 0 : i32
    %47 = arith.cmpi eq, %arg1, %c0_i32 : i32
    %48 = arith.extui %47 : i1 to i32
    %c0_i32_18 = arith.constant 0 : i32
    %49 = arith.cmpi ne, %48, %c0_i32_18 : i32
    scf.if %49 {
      %cst_28 = arith.constant 0.000000e+00 : f32
      %67 = vector.broadcast %cst_28 : f32 to vector<1x1x3xf32>
      %c0_29 = arith.constant 0 : index
      %c0_30 = arith.constant 0 : index
      %c0_31 = arith.constant 0 : index
      %68 = vector.load %arg6[%c0_29, %c0_30, %c0_31] : memref<1x1x3xf32, #tpu.memory_space<vmem>>, vector<1x1x3xf32>
      tpu.vector_store %arg6[%c0_29, %c0_30, %c0_31], %67 {strides = array<i32>} : memref<1x1x3xf32, #tpu.memory_space<vmem>>, vector<1x1x3xf32>,
    } else {
    }
    %c0_19 = arith.constant 0 : index
    %c0_20 = arith.constant 0 : index
    %c0_21 = arith.constant 0 : index
    %50 = vector.load %arg6[%c0_19, %c0_20, %c0_21] : memref<1x1x3xf32, #tpu.memory_space<vmem>>, vector<1x1x3xf32>
    %c1_i32 = arith.constant 1 : i32
    %51 = vector.broadcast %c1_i32 : i32 to vector<1x1x3xi32>
    %52 = arith.cmpi eq, %46, %51 : vector<1x1x3xi32>
    %cst_22 = arith.constant 0.000000e+00 : f32
    %53 = vector.broadcast %41 : f32 to vector<1x1x3xf32>
    %54 = vector.broadcast %cst_22 : f32 to vector<1x1x3xf32>
    %55 = arith.select %52, %53, %54 : vector<1x1x3xi1>, vector<1x1x3xf32>
    %c2_i32 = arith.constant 2 : i32
    %56 = vector.broadcast %c2_i32 : i32 to vector<1x1x3xi32>
    %57 = arith.cmpi eq, %46, %56 : vector<1x1x3xi32>
    %cst_23 = arith.constant 0.000000e+00 : f32
    %58 = vector.broadcast %45 : f32 to vector<1x1x3xf32>
    %59 = vector.broadcast %cst_23 : f32 to vector<1x1x3xf32>
    %60 = arith.select %57, %58, %59 : vector<1x1x3xi1>, vector<1x1x3xf32>
    %61 = arith.addf %55, %60 : vector<1x1x3xf32>
    %62 = arith.addf %50, %61 : vector<1x1x3xf32>
    %c0_24 = arith.constant 0 : index
    %c0_25 = arith.constant 0 : index
    %c0_26 = arith.constant 0 : index
    %63 = vector.load %arg6[%c0_24, %c0_25, %c0_26] : memref<1x1x3xf32, #tpu.memory_space<vmem>>, vector<1x1x3xf32>
    tpu.vector_store %arg6[%c0_24, %c0_25, %c0_26], %62 {strides = array<i32>} : memref<1x1x3xf32, #tpu.memory_space<vmem>>, vector<1x1x3xf32>,
    %64 = arith.cmpi eq, %arg0, %arg1 : i32
    %65 = arith.extui %64 : i1 to i32
    %c0_i32_27 = arith.constant 0 : i32
    %66 = arith.cmpi ne, %65, %c0_i32_27 : i32
    scf.if %66 {
      %67 = tpu.iota {dimensions = array<i32: 0>} : vector<8x8xi32>
      %68 = tpu.iota {dimensions = array<i32: 1>} : vector<8x8xi32>
      %69 = arith.cmpi eq, %67, %68 : vector<8x8xi32>
      %cst_28 = arith.constant 1.000000e+00 : f32
      %70 = vector.broadcast %cst_28 : f32 to vector<8x8xf32>
      %71 = arith.subf %70, %22 : vector<8x8xf32>
      %cst_29 = arith.constant 0.000000e+00 : f32
      %72 = vector.broadcast %cst_29 : f32 to vector<8x8xf32>
      %73 = arith.select %69, %71, %72 : vector<8x8xi1>, vector<8x8xf32>
      %74 = vector.shape_cast %73 : vector<8x8xf32> to vector<1x8x8xf32>
      %cst_30 = arith.constant dense<0.000000e+00> : vector<1xf32>
      %75 = vector.multi_reduction <add>, %74, %cst_30 [1, 2] : vector<1x8x8xf32> to vector<1xf32>
      %76 = vector.shape_cast %75 : vector<1xf32> to vector<1x1x1xf32>
      %77 = vector.extract %76[0, 0, 0] : f32 from vector<1x1x1xf32>
      %c0_31 = arith.constant 0 : index
      %c0_32 = arith.constant 0 : index
      %c0_33 = arith.constant 0 : index
      %78 = vector.load %arg6[%c0_31, %c0_32, %c0_33] : memref<1x1x3xf32, #tpu.memory_space<vmem>>, vector<1x1x3xf32>
      %c0_i32_34 = arith.constant 0 : i32
      %79 = vector.broadcast %c0_i32_34 : i32 to vector<1x1x3xi32>
      %80 = arith.cmpi eq, %46, %79 : vector<1x1x3xi32>
      %cst_35 = arith.constant 0.000000e+00 : f32
      %81 = vector.broadcast %77 : f32 to vector<1x1x3xf32>
      %82 = vector.broadcast %cst_35 : f32 to vector<1x1x3xf32>
      %83 = arith.select %80, %81, %82 : vector<1x1x3xi1>, vector<1x1x3xf32>
      %84 = arith.addf %78, %83 : vector<1x1x3xf32>
      %c0_36 = arith.constant 0 : index
      %c0_37 = arith.constant 0 : index
      %c0_38 = arith.constant 0 : index
      %85 = vector.load %arg6[%c0_36, %c0_37, %c0_38] : memref<1x1x3xf32, #tpu.memory_space<vmem>>, vector<1x1x3xf32>
      tpu.vector_store %arg6[%c0_36, %c0_37, %c0_38], %84 {strides = array<i32>} : memref<1x1x3xf32, #tpu.memory_space<vmem>>, vector<1x1x3xf32>,
    } else {
    }
    return
  }
  func.func @transform_0(%arg0: i32, %arg1: i32) -> (i32, i32) {
    %c0_i32 = arith.constant 0 : i32
    %c0_i32_0 = arith.constant 0 : i32
    return %arg0, %c0_i32 : i32, i32
  }
  func.func @transform_1(%arg0: i32, %arg1: i32) -> (i32, i32) {
    %c0_i32 = arith.constant 0 : i32
    %c0_i32_0 = arith.constant 0 : i32
    return %c0_i32, %arg1 : i32, i32
  }
  func.func @transform_2(%arg0: i32, %arg1: i32) -> (i32, i32) {
    %c0_i32 = arith.constant 0 : i32
    %c0_i32_0 = arith.constant 0 : i32
    return %arg0, %c0_i32 : i32, i32
  }
  func.func @transform_3(%arg0: i32, %arg1: i32) -> (i32, i32) {
    %c0_i32 = arith.constant 0 : i32
    %c0_i32_0 = arith.constant 0 : i32
    return %arg1, %c0_i32 : i32, i32
  }
  func.func @transform_4(%arg0: i32, %arg1: i32) -> (i32, i32, i32) {
    %c0_i32 = arith.constant 0 : i32
    %c0_i32_0 = arith.constant 0 : i32
    %c0_i32_1 = arith.constant 0 : i32
    return %arg0, %c0_i32, %c0_i32_0 : i32, i32, i32
  }
}

</mosaic_0001>

<llo_original>
// kernel: tpu_custom_call.1
$region0: #{tpu_custom_call.1}
  #allocation0 [shape = 'u32[]', space=smem, size = 0x4, offset = 0x4, fixed_abs, tag = 'smem constant byte address 0x4 - core index']
  #allocation1 [shape = 'u32[72,128]{1,0:T(1,128)}', space=vmem, size = 0x9000, scoped, tag = 'internal scratch']
  %s0 = inlined_call_operand.vmem [shape: s32[8,1], index: 0, kind: input, shape index: {}]
  %s1 = inlined_call_operand.vmem [shape: s32[1,8], index: 1, kind: input, shape index: {}]
  %s2 = inlined_call_operand.vmem [shape: f32[8,32], index: 2, kind: input, shape index: {}]
  %s3 = inlined_call_operand.hbm [shape: f32[8,32], index: 3, kind: input, shape index: {}]
  %s4 = inlined_call_operand.hbm [shape: f32[1,1,3], index: 4, kind: output, shape index: {}]
  %s5 = sld [smem:[#allocation0]]
  $region38: #{tpu_custom_call.1} parent=0
    _
  %s7 = ssub.s32 1, %s5
  %s8 = scalar_select 0, %s7, %s5
  $region1: #{tpu_custom_call.1} parent=0
    #allocation2 [shape = 'u8[4096]{0}', space=vmem, size = 0x1000, scoped, tag = 'input window, operand 3, single buffered']
    #allocation3 [shape = 's32[1]{0}', space=sflag, size = 0x4, scoped, tag = 'scoped memory for tpu_custom_call.1']
    #allocation4 [shape = 's32[1]{0}', space=sflag, size = 0x4, scoped, tag = 'scoped memory for tpu_custom_call.1']
    #allocation5 [shape = 'u8[512]{0}', space=vmem, size = 0x400, scoped, tag = 'output window, operand 0, single buffered']
    %9 = vsyncpa [#allocation3], 0
    %10 = vsyncpa [#allocation4], 0
    // Predicated region
    $region2: #{tpu_custom_call.1} parent=1 // pred_check
      _
    $region3: #{tpu_custom_call.1} parent=1 // pred_check_branch
      %12 = sbr.rel (0) target = $region5
    $region4: #{tpu_custom_call.1} parent=1 // pred_region
      _
    $region5: #{tpu_custom_call.1} parent=1 // pred_fallthru
      _
    // Predicated region
    $region6: #{tpu_custom_call.1} parent=1 // pred_check
      _
    $region7: #{tpu_custom_call.1} parent=1 // pred_check_branch
      %14 = sbr.rel (0) target = $region9
    $region8: #{tpu_custom_call.1} parent=1 // pred_region
      _
    $region9: #{tpu_custom_call.1} parent=1 // pred_fallthru
      _
    // Predicated region
    $region10: #{tpu_custom_call.1} parent=1 // pred_check
      _
    $region11: #{tpu_custom_call.1} parent=1 // pred_check_branch
      %16 = sbr.rel (0) target = $region13
    $region12: #{tpu_custom_call.1} parent=1 // pred_region
      _
    $region13: #{tpu_custom_call.1} parent=1 // pred_fallthru
      _
    // Predicated region
    $region14: #{tpu_custom_call.1} parent=1 // pred_check
      _
    $region15: #{tpu_custom_call.1} parent=1 // pred_check_branch
      %18 = sbr.rel (0) target = $region17
    $region16: #{tpu_custom_call.1} parent=1 // pred_region
      %20 = vsyncadd [#allocation3], 0
      %s22 = sshll.u32 %s3, 4
      %s23 = int_to_ptr.hbm [resolvable:$true] %s22
      %s24 = sshll.u32 [#allocation2], 4
      %s25 = int_to_ptr.vmem [resolvable:$true] %s24
      %27 = dma.hbm_to_vmem [thread:$0]  %s23, 128, %s25, [#allocation3]
    $region17: #{tpu_custom_call.1} parent=1 // pred_fallthru
      _
    // Predicated region
    $region18: #{tpu_custom_call.1} parent=1 // pred_check
      _
    $region19: #{tpu_custom_call.1} parent=1 // pred_check_branch
      %29 = sbr.rel (0) target = $region21
    $region20: #{tpu_custom_call.1} parent=1 // pred_region
      %31 = dma.done [#allocation3], 128
    $region21: #{tpu_custom_call.1} parent=1 // pred_fallthru
      _
    %v32 = vld [vmem:[%s2] sm:$0xff]
    %v33 = vld [vmem:[#allocation2] sm:$0xff]
    %v34 = vmul.f32 %v32, %v32
    %vm35 = vcmask 261120
    %v36 = vsel %vm35, %v34, 0.0
    %37 = vadd.xlane.f32.xlu0 %v36
    %v38 = vpop.xlane.xlu0 %37
    %v39 = vrsqrt.pop %v38
    %v40 = vmul.f32 %v39, %v38
    %v41 = vmul.f32 %v40, %v39
    %v42 = vmul.f32 0.5, %v41
    %v43 = vsub.f32 1.5, %v42
    %v44 = vmul.f32 %v39, %v43
    %v45 = vmul.f32 %v38, %v44
    %vm46 = vcmp.eq.f32.partialorder %v38, inf
    %v47 = vsel %vm46, %v38, %v45
    %vm48 = vcmp.eq.f32.partialorder %v38, 0.0
    %v49 = vand.u32 %v38, 2147483648
    %v50 = vsel %vm48, %v49, %v47
    %v51 = vmul.f32 %v33, %v33
    %v52 = vsel %vm35, %v51, 0.0
    %53 = vadd.xlane.f32.xlu0 %v52
    %v54 = vpop.xlane.xlu0 %53
    %v55 = vrsqrt.pop %v54
    %v56 = vmul.f32 %v55, %v54
    %v57 = vmul.f32 %v56, %v55
    %v58 = vmul.f32 0.5, %v57
    %v59 = vsub.f32 1.5, %v58
    %v60 = vmul.f32 %v55, %v59
    %v61 = vmul.f32 %v54, %v60
    %vm62 = vcmp.eq.f32.partialorder %v54, inf
    %v63 = vsel %vm62, %v54, %v61
    %vm64 = vcmp.eq.f32.partialorder %v54, 0.0
    %v65 = vand.u32 %v54, 2147483648
    %v66 = vsel %vm64, %v65, %v63
    %v67 = vmax.f32 %v50, 1e-12
    %v68 = vrcp.pop %v67
    %v69 = vmul.f32 %v67, %v68
    %v70 = vsub.f32 1.0, %v69
    %v71 = vmul.f32 %v68, %v70
    %v72 = vadd.f32 %v68, %v71
    %vm73 = vweird.f32 %v67
    %vm74 = vweird.f32 %v68
    %vm75 = vmor %vm73, %vm74
    %v76 = vsel %vm75, %v68, %v72
    %v77 = vand.u32 2147483647, %v67
    %vm78 = vcmp.eq.f32.partialorder %v77, 8.507059e+37
    %v79 = vand.u32 %v67, 2147483648
    %v80 = vor.u32 1.1754944e-38, %v79
    %v81 = vsel %vm78, %v80, %v76
    %v82 = vmul.f32 1.0, %v81
    %v83 = vmul.f32 %v32, %v82
    %v84 = vmax.f32 %v66, 1e-12
    %v85 = vrcp.pop %v84
    %v86 = vmul.f32 %v84, %v85
    %v87 = vsub.f32 1.0, %v86
    %v88 = vmul.f32 %v85, %v87
    %v89 = vadd.f32 %v85, %v88
    %vm90 = vweird.f32 %v84
    %vm91 = vweird.f32 %v85
    %vm92 = vmor %vm90, %vm91
    %v93 = vsel %vm92, %v85, %v89
    %v94 = vand.u32 2147483647, %v84
    %vm95 = vcmp.eq.f32.partialorder %v94, 8.507059e+37
    %v96 = vand.u32 %v84, 2147483648
    %v97 = vor.u32 1.1754944e-38, %v96
    %v98 = vsel %vm95, %v97, %v93
    %v99 = vmul.f32 1.0, %v98
    %v100 = vmul.f32 %v33, %v99
    %v102 = vsel %vm35, %v83, 0
    %v105 = vsel %vm35, %v100, 0
    %107 = vmatpush.xpose.msra.mxu0 0.0
    %108 = vmatpush.xpose.msra.mxu0 0.0
    %109 = vmatpush.xpose.msra.mxu0 0.0
    %110 = vmatpush.xpose.msra.mxu0 0.0
    %111 = vmatpush.xpose.msra.mxu0 0.0
    %112 = vmatpush.xpose.msra.mxu0 0.0
    %113 = vmatpush.xpose.msra.mxu0 0.0
    %114 = vmatpush.xpose.msra.mxu0 0.0
    %115 = vmatpush.xpose.msra.mxu0 0.0
    %116 = vmatpush.xpose.msra.mxu0 0.0
    %117 = vmatpush.xpose.msra.mxu0 0.0
    %118 = vmatpush.xpose.msra.mxu0 0.0
    %119 = vmatpush.xpose.msra.mxu0 0.0
    %120 = vmatpush.xpose.msra.mxu0 0.0
    %121 = vmatpush.xpose.msra.mxu0 0.0
    %122 = vmatpush.xpose.msra.mxu0 %v105
    %123 = vmatmul.f32.gmra.mxu0 %v102
    %v124 = vpop.f32.mrf.mxu0
    %v125 = vadd.f32 0.0, %v124
    %126 = vdwg.mxu0
    %v127 = vld [vmem:[%s0] sm:$0xff]
    %v128 = vld [vmem:[%s1] sm:$0x1]
    %129 = vset.pattern.permute.xlu0 0
    %130 = vperm.xlu0 %129, %v127
    %v131 = vpop.permute.xlu0 %130
    %v132 = vperm.slane %v128, 0
    %vm133 = vcmp.ne.s32.totalorder %v131, %v132
    %vm134 = vcmp.ne.f32.partialorder %v125, 1.0
    %vm135 = vmand %vm133, %vm134
    %v136 = vsel %vm135, 1, 0
    %v137 = vcvt.s32.f32 %v136
    %v138 = vadd.f32 %v125, -0.3
    %v139 = vmax.f32 %v138, 0.0
    %v140 = vmul.f32 %v139, %v137
    %vm141 = vcmask 64512
    %v142 = vsel %vm141, %v140, 0.0
    %143 = vadd.xlane.f32.xlu0 %v142
    %v144 = vpop.xlane.xlu0 %143
    %v145 = vrot.slane %v144, 4
    %v146 = vadd.f32 %v144, %v145
    %v147 = vrot.slane %v146, 2
    %v148 = vadd.f32 %v146, %v147
    %v149 = vrot.slane %v148, 1
    %v150 = vadd.f32 %v148, %v149
    %s151 = vtos %v150
    %v152 = vsel %vm141, %v137, 0.0
    %153 = vadd.xlane.f32.xlu0 %v152
    %v154 = vpop.xlane.xlu0 %153
    %v155 = vrot.slane %v154, 4
    %v156 = vadd.f32 %v154, %v155
    %v157 = vrot.slane %v156, 2
    %v158 = vadd.f32 %v156, %v157
    %v159 = vrot.slane %v158, 1
    %v160 = vadd.f32 %v158, %v159
    %s161 = vtos %v160
    %v162 = vlaneseq
    %v163 = vand.u32 %v162, 127
    %p164 = scmp.eq.s32.totalorder 0, 0
    // Predicated region
    $region22: #{tpu_custom_call.1} parent=1 // pred_check
      %p165 = pneg %p164
    $region23: #{tpu_custom_call.1} parent=1 // pred_check_branch
      %167 = sbr.rel (%p165) target = $region25
    $region24: #{tpu_custom_call.1} parent=1 // pred_region
      %vm168 = vcmask 16384
      %169 = vst.msk [vmem:[#allocation5] sm:$0x1] %vm168, 0.0
    $region25: #{tpu_custom_call.1} parent=1 // pred_fallthru
      _
    %v170 = vld [vmem:[#allocation5] sm:$0x1]
    %vm171 = vcmp.eq.s32.totalorder %v163, 1
    %v172 = vstv %s151
    %v173 = vsel %vm171, %v172, 0.0
    %vm174 = vcmp.eq.s32.totalorder %v163, 2
    %v175 = vstv %s161
    %v176 = vsel %vm174, %v175, 0.0
    %v177 = vadd.f32 %v173, %v176
    %v178 = vadd.f32 %v170, %v177
    %vm179 = vcmask 16384
    %180 = vst.msk [vmem:[#allocation5] sm:$0x1] %vm179, %v178
    %p181 = scmp.eq.s32.totalorder 0, 0
    // Predicated region
    $region26: #{tpu_custom_call.1} parent=1 // pred_check
      %p182 = pneg %p181
    $region27: #{tpu_custom_call.1} parent=1 // pred_check_branch
      %184 = sbr.rel (%p182) target = $region29
    $region28: #{tpu_custom_call.1} parent=1 // pred_region
      %v185 = vlaneseq
      %v186 = vshrl.u32 %v185, 7
      %vm187 = vcmp.eq.s32.totalorder %v186, %v163
      %v188 = vsub.f32 1.0, %v125
      %v189 = vsel %vm187, %v188, 0.0
      %v190 = vsel %vm141, %v189, 0.0
      %191 = vadd.xlane.f32.xlu0 %v190
      %v192 = vpop.xlane.xlu0 %191
      %v193 = vrot.slane %v192, 4
      %v194 = vadd.f32 %v192, %v193
      %v195 = vrot.slane %v194, 2
      %v196 = vadd.f32 %v194, %v195
      %v197 = vrot.slane %v196, 1
      %v198 = vadd.f32 %v196, %v197
      %s199 = vtos %v198
      %v200 = vld [vmem:[#allocation5] sm:$0x1]
      %vm201 = vcmp.eq.s32.totalorder %v163, 0
      %v202 = vstv %s199
      %v203 = vsel %vm201, %v202, 0.0
      %v204 = vadd.f32 %v200, %v203
      %205 = vst.msk [vmem:[#allocation5] sm:$0x1] %vm179, %v204
    $region29: #{tpu_custom_call.1} parent=1 // pred_fallthru
      _
    // Predicated region
    $region30: #{tpu_custom_call.1} parent=1 // pred_check
      _
    $region31: #{tpu_custom_call.1} parent=1 // pred_check_branch
      %207 = sbr.rel (0) target = $region33
    $region32: #{tpu_custom_call.1} parent=1 // pred_region
      %209 = vsyncadd [#allocation4], 0
      %s211 = sshll.u32 [#allocation5], 4
      %s212 = int_to_ptr.vmem [resolvable:$true] %s211
      %s213 = sshll.u32 %s4, 4
      %s214 = int_to_ptr.hbm [resolvable:$true] %s213
      %216 = dma.vmem_to_hbm [thread:$0]  %s212, 16, %s214, [#allocation4]
    $region33: #{tpu_custom_call.1} parent=1 // pred_fallthru
      _
    // Predicated region
    $region34: #{tpu_custom_call.1} parent=1 // pred_check
      _
    $region35: #{tpu_custom_call.1} parent=1 // pred_check_branch
      %218 = sbr.rel (0) target = $region37
    $region36: #{tpu_custom_call.1} parent=1 // pred_region
      %220 = dma.done [#allocation4], 16
    $region37: #{tpu_custom_call.1} parent=1 // pred_fallthru
      _
    %221 = vsyncpa [#allocation3], 1
    %222 = vsyncpa [#allocation4], 1

</llo_original>
